<compile_context>
chip_gen: v7x
topology: tpu7x:2x2x1
jax: 0.10.0
libtpu: 0.0.40
codegen_flags: <defaults>
</compile_context>

<pallas_src>
import functools

import jax
import jax.numpy as jnp
import numpy as np
from jax import lax
from jax.experimental import pallas as pl
from jax.experimental.pallas import tpu as pltpu

CONV_OUT = 128      # Conv1d out_channels
FC_OUT = 3          # Linear out_features
FC_OUT_PAD = 128    # lane-dense padded fc width; real logits live in [:, :FC_OUT]


def _round_up(x, m):
    return (x + m - 1) // m * m


def clip_head_kernel(h_ref, w1_ref, b1_ref, w2_ref, b2_ref, o_ref, acc_ref,
                     *, seq_len, mask_seq):
    """One sequence chunk per grid step; running max in acc_ref; fc on last step."""
    step = pl.program_id(0)
    n_steps = pl.num_programs(0)
    Bp, T, H = h_ref.shape

    @pl.when(step == 0)
    def _():
        acc_ref[...] = jnp.full(acc_ref.shape, -jnp.inf, dtype=acc_ref.dtype)

    # Conv1d(in=H, out=128, kernel_size=1) == per-position matmul + bias.
    # bf16 operands for the MXU, f32 accumulation; activation math in f32.
    h = h_ref[...].reshape(Bp * T, H)                               # bf16
    x = jnp.dot(h, w1_ref[...], preferred_element_type=jnp.float32)  # (Bp*T, 128) f32
    x = jnp.tanh(x + b1_ref[...])
    x = x.reshape(Bp, T, CONV_OUT)

    if mask_seq:
        # Sequence was padded up to a multiple of the tile; padded positions must
        # not win the max.
        pos = step * T + lax.broadcasted_iota(jnp.int32, (Bp, T, CONV_OUT), 1)
        x = jnp.where(pos < seq_len, x, -jnp.inf)

    # AdaptiveMaxPool1d(1): rolling max over the sequence axis.
    acc_ref[...] = jnp.maximum(acc_ref[...], jnp.max(x, axis=1))

    # Dropout(p=0.5): identity at inference time.

    @pl.when(step == n_steps - 1)
    def _():
        pooled = acc_ref[...]                                        # (Bp, 128) f32
        logits = jnp.dot(pooled, w2_ref[...],
                         preferred_element_type=jnp.float32) + b2_ref[...]
        o_ref[...] = jax.nn.sigmoid(logits)                          # cols >= 3 are junk


def clip_text_to_pixel_head(hidden_states, w1, b1, w2_pad, b2_pad, *, seq_tile=None):
    B, S, H = hidden_states.shape

    # Sublane-pad batch to a multiple of 8 for unmasked stores / aligned tiles.
    Bp = max(_round_up(B, 8), 8)

    # Pick the sequence tile: multiple of 8, capped so one bf16 hidden block stays
    # ~<= 8 MiB (so 2x double-buffering fits the 32 MiB scoped-VMEM default on every
    # chip, incl. v7x's 64 MiB VMEM). On v5e/v6e (128 MiB) larger tiles / Buffered(3)
    # would amortize per-step overhead further.
    if seq_tile is None:
        bytes_per_seq_row = Bp * H * 2                       # bf16
        max_rows = max(8, (8 * 1024 * 1024) // max(bytes_per_seq_row, 1))
        seq_tile = int(min(_round_up(S, 8), _round_up(min(max_rows, 2048), 8)))
    seq_tile = int(seq_tile)
    Sp = _round_up(S, seq_tile)
    n_steps = Sp // seq_tile

    # bf16 activation stream halves HBM traffic for the dominant input.
    h = hidden_states.astype(jnp.bfloat16)
    if Bp != B or Sp != S:
        h = jnp.pad(h, ((0, Bp - B), (0, Sp - S), (0, 0)))
    w1_bf = w1.astype(jnp.bfloat16)

    kernel = functools.partial(clip_head_kernel, seq_len=S, mask_seq=(Sp != S))

    flops = 2 * Bp * Sp * H * CONV_OUT + 2 * Bp * CONV_OUT * FC_OUT_PAD
    bytes_accessed = (h.size * 2 + w1_bf.size * 2
                      + (b1.size + w2_pad.size + b2_pad.size) * 4
                      + Bp * FC_OUT_PAD * 4)

    out = pl.pallas_call(
        kernel,
        out_shape=jax.ShapeDtypeStruct((Bp, FC_OUT_PAD), jnp.float32),
        grid=(n_steps,),
        in_specs=[
            pl.BlockSpec((Bp, seq_tile, H), lambda i: (0, i, 0)),
            # Parameter tiles: constant index_maps -> DMA'd once, not per step.
            pl.BlockSpec((H, CONV_OUT), lambda i: (0, 0)),
            pl.BlockSpec((1, CONV_OUT), lambda i: (0, 0)),
            pl.BlockSpec((CONV_OUT, FC_OUT_PAD), lambda i: (0, 0)),
            pl.BlockSpec((1, FC_OUT_PAD), lambda i: (0, 0)),
        ],
        out_specs=pl.BlockSpec((Bp, FC_OUT_PAD), lambda i: (0, 0)),
        scratch_shapes=[pltpu.VMEM((Bp, CONV_OUT), jnp.float32)],
        compiler_params=pltpu.CompilerParams(
            dimension_semantics=("arbitrary",),   # seq axis is a (max) reduction
        ),
        cost_estimate=pl.CostEstimate(
            flops=flops,
            transcendentals=Bp * Sp * CONV_OUT + Bp * FC_OUT_PAD,
            bytes_accessed=bytes_accessed,
        ),
    )(h, w1_bf, b1, w2_pad, b2_pad)
    return out[:B, :FC_OUT]


def reference(hidden_states, w1, b1, w2, b2):
    x = jnp.tanh(jnp.einsum("bsh,hc->bsc", hidden_states, w1) + b1)   # (B, S, 128)
    pooled = jnp.max(x, axis=1)                                       # (B, 128)
    return jax.nn.sigmoid(pooled @ w2 + b2)                           # (B, 3)


if __name__ == "__main__":
    B, S, H, VOCAB = 2, 16, 32, 64

    key = jax.random.PRNGKey(0)
    k_emb, k_ids, k_w1, k_b1, k_w2, k_b2 = jax.random.split(key, 6)

    # TODO(synk): the CLIP text encoder itself (embeddings + transformer stack) is an
    # external module passed into __init__; represented here by a deterministic
    # embedding lookup producing last_hidden_state [B, S, H].
    embedding = jax.random.normal(k_emb, (VOCAB, H), jnp.float32) * 0.02
    input_ids = jax.random.randint(k_ids, (B, S), 0, VOCAB)
    hidden_states = embedding[input_ids]                              # (B, S, H) f32

    # Deterministic head parameters (shapes from the module's __init__).
    w1 = jax.random.normal(k_w1, (H, CONV_OUT), jnp.float32) / jnp.sqrt(H)
    b1 = jax.random.normal(k_b1, (1, CONV_OUT), jnp.float32) * 0.01
    w2 = jax.random.normal(k_w2, (CONV_OUT, FC_OUT), jnp.float32) / jnp.sqrt(CONV_OUT)
    b2 = jax.random.normal(k_b2, (1, FC_OUT), jnp.float32) * 0.01

    # Pad fc params to 128 lanes for lane-dense kernel compute/stores.
    w2_pad = jnp.zeros((CONV_OUT, FC_OUT_PAD), jnp.float32).at[:, :FC_OUT].set(w2)
    b2_pad = jnp.zeros((1, FC_OUT_PAD), jnp.float32).at[:, :FC_OUT].set(b2)

    # Case 1: S=16 tiled by 8 -> 2-step grid exercising the pipelined running max
    # + pl.when finalize.
    out = clip_text_to_pixel_head(hidden_states, w1, b1, w2_pad, b2_pad, seq_tile=8)
    jax.block_until_ready(out)
    ref = reference(hidden_states, w1, b1, w2, b2)
    assert out.shape == (B, FC_OUT)
    np.testing.assert_allclose(np.asarray(out), np.asarray(ref), rtol=2e-3, atol=2e-3)

    # Case 2: ragged S=12 (not a multiple of the 8-row tile) -> exercises the
    # in-kernel sequence mask and batch/seq padding paths.
    hs12 = hidden_states[:, :12, :]
    out12 = clip_text_to_pixel_head(hs12, w1, b1, w2_pad, b2_pad, seq_tile=8)
    jax.block_until_ready(out12)
    ref12 = reference(hs12, w1, b1, w2, b2)
    np.testing.assert_allclose(np.asarray(out12), np.asarray(ref12), rtol=2e-3, atol=2e-3)

    print("KERNEL_OK")
</pallas_src>

<mosaic_0001>
module attributes {stable_mosaic.version = 11 : i64} {
  func.func @clip_head_kernel(%arg0: i32, %arg1: memref<8x8x32xbf16, #tpu.memory_space<vmem>>, %arg2: memref<32x128xbf16, #tpu.memory_space<vmem>>, %arg3: memref<1x128xf32, #tpu.memory_space<vmem>>, %arg4: memref<128x128xf32, #tpu.memory_space<vmem>>, %arg5: memref<1x128xf32, #tpu.memory_space<vmem>>, %arg6: memref<8x128xf32, #tpu.memory_space<vmem>>, %arg7: memref<8x128xf32, #tpu.memory_space<vmem>>) attributes {dimension_semantics = [#tpu.dimension_semantics<arbitrary>], iteration_bounds = array<i64: 2>, scalar_prefetch = 0 : i64, scratch_operands = 1 : i64, tpu.core_type = #tpu.core_type<tc>, window_params = [{transform_indices = @transform_0, window_bounds = array<i64: 8, 8, 32>}, {pipeline_mode = #tpu.pipeline_mode<synchronous>, transform_indices = @transform_1, window_bounds = array<i64: 32, 128>}, {pipeline_mode = #tpu.pipeline_mode<synchronous>, transform_indices = @transform_2, window_bounds = array<i64: 1, 128>}, {pipeline_mode = #tpu.pipeline_mode<synchronous>, transform_indices = @transform_3, window_bounds = array<i64: 128, 128>}, {pipeline_mode = #tpu.pipeline_mode<synchronous>, transform_indices = @transform_4, window_bounds = array<i64: 1, 128>}, {pipeline_mode = #tpu.pipeline_mode<synchronous>, transform_indices = @transform_5, window_bounds = array<i64: 8, 128>}]} {
    %c0_i32 = arith.constant 0 : i32
    %0 = arith.cmpi eq, %arg0, %c0_i32 : i32
    %1 = arith.extui %0 : i1 to i32
    %c0_i32_0 = arith.constant 0 : i32
    %2 = arith.cmpi ne, %1, %c0_i32_0 : i32
    scf.if %2 {
      %cst_13 = arith.constant 0xFF800000 : f32
      %19 = vector.broadcast %cst_13 : f32 to vector<8x128xf32>
      %c0_14 = arith.constant 0 : index
      %c0_15 = arith.constant 0 : index
      %20 = vector.load %arg7[%c0_14, %c0_15] : memref<8x128xf32, #tpu.memory_space<vmem>>, vector<8x128xf32>
      tpu.vector_store %arg7[%c0_14, %c0_15], %19 {strides = array<i32>} : memref<8x128xf32, #tpu.memory_space<vmem>>, vector<8x128xf32>,
    } else {
    }
    %c0 = arith.constant 0 : index
    %c0_1 = arith.constant 0 : index
    %c0_2 = arith.constant 0 : index
    %3 = vector.load %arg1[%c0, %c0_1, %c0_2] : memref<8x8x32xbf16, #tpu.memory_space<vmem>>, vector<8x8x32xbf16>
    %4 = vector.shape_cast %3 : vector<8x8x32xbf16> to vector<64x32xbf16>
    %c0_3 = arith.constant 0 : index
    %c0_4 = arith.constant 0 : index
    %5 = vector.load %arg2[%c0_3, %c0_4] : memref<32x128xbf16, #tpu.memory_space<vmem>>, vector<32x128xbf16>
    %cst = arith.constant dense<0.000000e+00> : vector<64x128xf32>
    %6 = tpu.matmul %4, %5, %cst {dimension_numbers = #tpu.dot_dimension_numbers<[1], [0], [0], [1], [0, 0, 1, 1], [], []>} : vector<64x32xbf16>, vector<32x128xbf16>, vector<64x128xf32> -> vector<64x128xf32>
    %c0_5 = arith.constant 0 : index
    %c0_6 = arith.constant 0 : index
    %7 = vector.load %arg3[%c0_5, %c0_6] : memref<1x128xf32, #tpu.memory_space<vmem>>, vector<1x128xf32>
    %8 = vector.broadcast %7 : vector<1x128xf32> to vector<64x128xf32>
    %9 = arith.addf %6, %8 : vector<64x128xf32>
    %10 = math.tanh %9 : vector<64x128xf32>
    %11 = vector.shape_cast %10 : vector<64x128xf32> to vector<8x8x128xf32>
    %c0_7 = arith.constant 0 : index
    %c0_8 = arith.constant 0 : index
    %12 = vector.load %arg7[%c0_7, %c0_8] : memref<8x128xf32, #tpu.memory_space<vmem>>, vector<8x128xf32>
    %cst_9 = arith.constant dense<0xFF800000> : vector<8x128xf32>
    %13 = vector.multi_reduction <maximumf>, %11, %cst_9 [1] : vector<8x8x128xf32> to vector<8x128xf32>
    %14 = arith.maximumf %12, %13 : vector<8x128xf32>
    %c0_10 = arith.constant 0 : index
    %c0_11 = arith.constant 0 : index
    %15 = vector.load %arg7[%c0_10, %c0_11] : memref<8x128xf32, #tpu.memory_space<vmem>>, vector<8x128xf32>
    tpu.vector_store %arg7[%c0_10, %c0_11], %14 {strides = array<i32>} : memref<8x128xf32, #tpu.memory_space<vmem>>, vector<8x128xf32>,
    %c1_i32 = arith.constant 1 : i32
    %16 = arith.cmpi eq, %arg0, %c1_i32 : i32
    %17 = arith.extui %16 : i1 to i32
    %c0_i32_12 = arith.constant 0 : i32
    %18 = arith.cmpi ne, %17, %c0_i32_12 : i32
    scf.if %18 {
      %c0_13 = arith.constant 0 : index
      %c0_14 = arith.constant 0 : index
      %19 = vector.load %arg7[%c0_13, %c0_14] : memref<8x128xf32, #tpu.memory_space<vmem>>, vector<8x128xf32>
      %c0_15 = arith.constant 0 : index
      %c0_16 = arith.constant 0 : index
      %20 = vector.load %arg4[%c0_15, %c0_16] : memref<128x128xf32, #tpu.memory_space<vmem>>, vector<128x128xf32>
      %cst_17 = arith.constant dense<0.000000e+00> : vector<8x128xf32>
      %21 = tpu.matmul %19, %20, %cst_17 {dimension_numbers = #tpu.dot_dimension_numbers<[1], [0], [0], [1], [0, 0, 1, 1], [], []>} : vector<8x128xf32>, vector<128x128xf32>, vector<8x128xf32> -> vector<8x128xf32>
      %c0_18 = arith.constant 0 : index
      %c0_19 = arith.constant 0 : index
      %22 = vector.load %arg5[%c0_18, %c0_19] : memref<1x128xf32, #tpu.memory_space<vmem>>, vector<1x128xf32>
      %23 = vector.broadcast %22 : vector<1x128xf32> to vector<8x128xf32>
      %24 = arith.addf %21, %23 : vector<8x128xf32>
      %25 = arith.negf %24 : vector<8x128xf32>
      %26 = math.exp %25 : vector<8x128xf32>
      %cst_20 = arith.constant 1.000000e+00 : f32
      %27 = vector.broadcast %cst_20 : f32 to vector<8x128xf32>
      %28 = arith.addf %27, %26 : vector<8x128xf32>
      %29 = arith.divf %27, %28 : vector<8x128xf32>
      %c0_21 = arith.constant 0 : index
      %c0_22 = arith.constant 0 : index
      %30 = vector.load %arg6[%c0_21, %c0_22] : memref<8x128xf32, #tpu.memory_space<vmem>>, vector<8x128xf32>
      tpu.vector_store %arg6[%c0_21, %c0_22], %29 {strides = array<i32>} : memref<8x128xf32, #tpu.memory_space<vmem>>, vector<8x128xf32>,
    } else {
    }
    return
  }
  func.func @transform_0(%arg0: i32) -> (i32, i32, i32) {
    %c0_i32 = arith.constant 0 : i32
    %c0_i32_0 = arith.constant 0 : i32
    %c0_i32_1 = arith.constant 0 : i32
    return %c0_i32, %arg0, %c0_i32_0 : i32, i32, i32
  }
  func.func @transform_1(%arg0: i32) -> (i32, i32) {
    %c0_i32 = arith.constant 0 : i32
    %c0_i32_0 = arith.constant 0 : i32
    %c0_i32_1 = arith.constant 0 : i32
    return %c0_i32, %c0_i32_0 : i32, i32
  }
  func.func @transform_2(%arg0: i32) -> (i32, i32) {
    %c0_i32 = arith.constant 0 : i32
    %c0_i32_0 = arith.constant 0 : i32
    %c0_i32_1 = arith.constant 0 : i32
    return %c0_i32, %c0_i32_0 : i32, i32
  }
  func.func @transform_3(%arg0: i32) -> (i32, i32) {
    %c0_i32 = arith.constant 0 : i32
    %c0_i32_0 = arith.constant 0 : i32
    %c0_i32_1 = arith.constant 0 : i32
    return %c0_i32, %c0_i32_0 : i32, i32
  }
  func.func @transform_4(%arg0: i32) -> (i32, i32) {
    %c0_i32 = arith.constant 0 : i32
    %c0_i32_0 = arith.constant 0 : i32
    %c0_i32_1 = arith.constant 0 : i32
    return %c0_i32, %c0_i32_0 : i32, i32
  }
  func.func @transform_5(%arg0: i32) -> (i32, i32) {
    %c0_i32 = arith.constant 0 : i32
    %c0_i32_0 = arith.constant 0 : i32
    %c0_i32_1 = arith.constant 0 : i32
    return %c0_i32, %c0_i32_0 : i32, i32
  }
}

</mosaic_0001>

<llo_original>
// kernel: tpu_custom_call.1
$region0: #{tpu_custom_call.1}
  #allocation0 [shape = 'u32[]', space=smem, size = 0x4, offset = 0x4, fixed_abs, tag = 'smem constant byte address 0x4 - core index']
  #allocation1 [shape = 'u32[144,128]{1,0:T(1,128)}', space=vmem, size = 0x12000, scoped, tag = 'internal scratch']
  #allocation2 [shape = 'f32[8,128]{1,0:T(8,128)}', space=vmem, size = 0x1000, scoped, tag = 'scratch operand']
  %s0 = inlined_call_operand.hbm [shape: bf16[8,16,32], index: 0, kind: input, shape index: {}]
  %s1 = inlined_call_operand.hbm [shape: bf16[32,128], index: 1, kind: input, shape index: {}]
  %s2 = inlined_call_operand.vmem [shape: f32[1,128], index: 2, kind: input, shape index: {}]
  %s3 = inlined_call_operand.hbm [shape: f32[128,128], index: 3, kind: input, shape index: {}]
  %s4 = inlined_call_operand.vmem [shape: f32[1,128], index: 4, kind: input, shape index: {}]
  %s5 = inlined_call_operand.hbm [shape: f32[8,128], index: 5, kind: output, shape index: {}]
  %s6 = sld [smem:[#allocation0]]
  $region73: #{tpu_custom_call.1} parent=0
    _
  %s8 = ssub.s32 1, %s6
  %s9 = scalar_select 0, %s8, %s6
  $region1: #{tpu_custom_call.1} parent=0
    #allocation3 [shape = 'u8[32768]{0}', space=vmem, size = 0x8000, scoped, tag = 'input window, operand 0']
    #allocation4 [shape = 's32[2]{0}', space=sflag, size = 0x8, scoped, tag = 'scoped memory for tpu_custom_call.1']
    #allocation5 [shape = 's32[2]{0}', space=sflag, size = 0x8, scoped, tag = 'scoped memory for tpu_custom_call.1']
    #allocation6 [shape = 'u8[8192]{0}', space=vmem, size = 0x2000, scoped, tag = 'input window, operand 1, single buffered']
    #allocation7 [shape = 's32[1]{0}', space=sflag, size = 0x4, scoped, tag = 'scoped memory for tpu_custom_call.1']
    #allocation8 [shape = 'u8[65536]{0}', space=vmem, size = 0x10000, scoped, tag = 'input window, operand 3, single buffered']
    #allocation9 [shape = 'u8[4096]{0}', space=vmem, size = 0x1000, scoped, tag = 'output window, operand 0, single buffered']
    %10 = vsyncpa [#allocation4], 0
    %s11 = scalar_lea.sflag [#allocation4], 1
    %12 = vsyncpa %s11, 0
    %13 = vsyncpa [#allocation7], 0
    %14 = vsyncpa [#allocation5], 0
    loop: start=0, step=1, limit=4
    $region2: #{tpu_custom_call.1} parent=1 // loop_pre_header
      _
    $region3: #{tpu_custom_call.1} parent=1 // loop_header
      %s16 = sphi 0, %s20
      %p17 = scmp.ge.s32.totalorder %s16, 4
      %s26 = sphi 0, %s28
      %s29 = sphi 0, %s26
      %s30 = sphi 0, %s29
      %s46 = sphi 0, %s30
      %s50 = sphi 0, %s50
      %s52 = sphi 0, %s50
      %s53 = sphi 0, %s52
      %s67 = sphi 0, %s53
      %s71 = sphi 0, %s71
      %s73 = sphi 0, %s71
      %s74 = sphi 0, %s73
      %s88 = sphi 0, %s74
      %s92 = sphi 0, %s92
      %s94 = sphi 0, %s92
      %s95 = sphi 0, %s94
      %s109 = sphi 0, %s95
      %s113 = sphi 0, %s113
      %s115 = sphi 0, %s113
      %s116 = sphi 0, %s115
      %s130 = sphi 0, %s116
      %s134 = sphi 0, %s134
      %s136 = sphi 0, %s134
      %s137 = sphi 0, %s136
      %s151 = sphi 0, %s137
    $region4: #{tpu_custom_call.1} parent=1 // loop_header_branch
      %19 = sbr.rel (%p17) target = $region8
    $region5: #{tpu_custom_call.1} parent=1 // loop_body
      %s21 = ssub.s32 %s16, 1
      %s22 = ssub.s32 %s16, 2
      %s23 = sadd.s32 %s16, 1
      %s24 = ssub.s32 %s16, %s23
      %p25 = scmp.eq.s32.totalorder %s24, 0
      %s27 = sadd.s32 %s26, 1
      %s28 = scalar_select %p25, %s26, %s27
      %p31 = pneg %p25
      %p32 = scmp.eq.s32.totalorder %s16, 1
      %p33 = por %p31, %p32
      %p34 = scmp.ne.s32.totalorder %s26, %s29
      %p35 = scmp.eq.s32.totalorder %s16, 0
      %p36 = por %p34, %p35
      %p37 = scmp.ne.s32.totalorder %s26, %s29
      %p38 = scmp.eq.s32.totalorder %s21, 1
      %p39 = por %p37, %p38
      %p40 = scmp.ne.s32.totalorder %s29, %s30
      %p41 = scmp.eq.s32.totalorder %s21, 0
      %p42 = por %p40, %p41
      %p43 = scmp.ne.s32.totalorder %s29, %s30
      %p44 = scmp.eq.s32.totalorder %s22, 1
      %p45 = por %p43, %p44
      %p47 = scmp.ne.s32.totalorder %s30, %s46
      %p48 = scmp.eq.s32.totalorder %s22, 0
      %p49 = por %p47, %p48
      %s51 = sadd.s32 %s50, 1
      %p54 = scmp.eq.s32.totalorder %s16, 1
      %p55 = scmp.ne.s32.totalorder %s50, %s52
      %p56 = scmp.eq.s32.totalorder %s16, 0
      %p57 = por %p55, %p56
      %p58 = scmp.ne.s32.totalorder %s50, %s52
      %p59 = scmp.eq.s32.totalorder %s21, 1
      %p60 = por %p58, %p59
      %p61 = scmp.ne.s32.totalorder %s52, %s53
      %p62 = scmp.eq.s32.totalorder %s21, 0
      %p63 = por %p61, %p62
      %p64 = scmp.ne.s32.totalorder %s52, %s53
      %p65 = scmp.eq.s32.totalorder %s22, 1
      %p66 = por %p64, %p65
      %p68 = scmp.ne.s32.totalorder %s53, %s67
      %p69 = scmp.eq.s32.totalorder %s22, 0
      %p70 = por %p68, %p69
      %s72 = sadd.s32 %s71, 1
      %p75 = scmp.eq.s32.totalorder %s16, 1
      %p76 = scmp.ne.s32.totalorder %s71, %s73
      %p77 = scmp.eq.s32.totalorder %s16, 0
      %p78 = por %p76, %p77
      %p79 = scmp.ne.s32.totalorder %s71, %s73
      %p80 = scmp.eq.s32.totalorder %s21, 1
      %p81 = por %p79, %p80
      %p82 = scmp.ne.s32.totalorder %s73, %s74
      %p83 = scmp.eq.s32.totalorder %s21, 0
      %p84 = por %p82, %p83
      %p85 = scmp.ne.s32.totalorder %s73, %s74
      %p86 = scmp.eq.s32.totalorder %s22, 1
      %p87 = por %p85, %p86
      %p89 = scmp.ne.s32.totalorder %s74, %s88
      %p90 = scmp.eq.s32.totalorder %s22, 0
      %p91 = por %p89, %p90
      %s93 = sadd.s32 %s92, 1
      %p96 = scmp.eq.s32.totalorder %s16, 1
      %p97 = scmp.ne.s32.totalorder %s92, %s94
      %p98 = scmp.eq.s32.totalorder %s16, 0
      %p99 = por %p97, %p98
      %p100 = scmp.ne.s32.totalorder %s92, %s94
      %p101 = scmp.eq.s32.totalorder %s21, 1
      %p102 = por %p100, %p101
      %p103 = scmp.ne.s32.totalorder %s94, %s95
      %p104 = scmp.eq.s32.totalorder %s21, 0
      %p105 = por %p103, %p104
      %p106 = scmp.ne.s32.totalorder %s94, %s95
      %p107 = scmp.eq.s32.totalorder %s22, 1
      %p108 = por %p106, %p107
      %p110 = scmp.ne.s32.totalorder %s95, %s109
      %p111 = scmp.eq.s32.totalorder %s22, 0
      %p112 = por %p110, %p111
      %s114 = sadd.s32 %s113, 1
      %p117 = scmp.eq.s32.totalorder %s16, 1
      %p118 = scmp.ne.s32.totalorder %s113, %s115
      %p119 = scmp.eq.s32.totalorder %s16, 0
      %p120 = por %p118, %p119
      %p121 = scmp.ne.s32.totalorder %s113, %s115
      %p122 = scmp.eq.s32.totalorder %s21, 1
      %p123 = por %p121, %p122
      %p124 = scmp.ne.s32.totalorder %s115, %s116
      %p125 = scmp.eq.s32.totalorder %s21, 0
      %p126 = por %p124, %p125
      %p127 = scmp.ne.s32.totalorder %s115, %s116
      %p128 = scmp.eq.s32.totalorder %s22, 1
      %p129 = por %p127, %p128
      %p131 = scmp.ne.s32.totalorder %s116, %s130
      %p132 = scmp.eq.s32.totalorder %s22, 0
      %p133 = por %p131, %p132
      %s135 = sadd.s32 %s134, 1
      %p138 = scmp.eq.s32.totalorder %s16, 1
      %p139 = scmp.ne.s32.totalorder %s134, %s136
      %p140 = scmp.eq.s32.totalorder %s16, 0
      %p141 = por %p139, %p140
      %p142 = scmp.ne.s32.totalorder %s134, %s136
      %p143 = scmp.eq.s32.totalorder %s21, 1
      %p144 = por %p142, %p143
      %p145 = scmp.ne.s32.totalorder %s136, %s137
      %p146 = scmp.eq.s32.totalorder %s21, 0
      %p147 = por %p145, %p146
      %p148 = scmp.ne.s32.totalorder %s136, %s137
      %p149 = scmp.eq.s32.totalorder %s22, 1
      %p150 = por %p148, %p149
      %p152 = scmp.ne.s32.totalorder %s137, %s151
      %p153 = scmp.eq.s32.totalorder %s22, 0
      %p154 = por %p152, %p153
      %p155 = scmp.le.s32.totalorder 1, %s16
      %p156 = scmp.lt.s32.totalorder %s16, 3
      %p157 = pnand %p155, %p156
      %p158 = pneg %p157
      // Predicated region
      $region9: #{tpu_custom_call.1} parent=5 // pred_check
        _
      $region10: #{tpu_custom_call.1} parent=5 // pred_check_branch
        %160 = sbr.rel (%p157) target = $region12
      $region11: #{tpu_custom_call.1} parent=5 // pred_region
        %s161 = ssub.s32 %s16, 1
        // Predicated region
        $region13: #{tpu_custom_call.1} parent=11 // pred_check
          %p162 = pneg %p63
        $region14: #{tpu_custom_call.1} parent=11 // pred_check_branch
          %164 = sbr.rel (%p162) target = $region16
        $region15: #{tpu_custom_call.1} parent=11 // pred_region
          %s166 = ssub.s32 256, 256
          %167 = vsyncadd [#allocation7], %s166
          %s168 = sshll.u32 [#allocation6], 4
          %s169 = int_to_ptr.vmem [resolvable:$true] %s168
          %174 = dma.hbm_to_vmem [thread:$0]  %s1, 256, %s169, [#allocation7], 64, 64, 4
        $region16: #{tpu_custom_call.1} parent=11 // pred_fallthru
          _
        // Predicated region
        $region17: #{tpu_custom_call.1} parent=11 // pred_check
          %p175 = pneg %p84
        $region18: #{tpu_custom_call.1} parent=11 // pred_check_branch
          %177 = sbr.rel (%p175) target = $region20
        $region19: #{tpu_custom_call.1} parent=11 // pred_region
          _
        $region20: #{tpu_custom_call.1} parent=11 // pred_fallthru
          _
        // Predicated region
        $region21: #{tpu_custom_call.1} parent=11 // pred_check
          %p178 = pneg %p105
        $region22: #{tpu_custom_call.1} parent=11 // pred_check_branch
          %180 = sbr.rel (%p178) target = $region24
        $region23: #{tpu_custom_call.1} parent=11 // pred_region
          %s182 = ssub.s32 2048, 2048
          %183 = vsyncadd [#allocation7], %s182
          %s184 = sshll.u32 [#allocation8], 4
          %s185 = int_to_ptr.vmem [resolvable:$true] %s184
          %190 = dma.hbm_to_vmem [thread:$0]  %s3, 2048, %s185, [#allocation7], 128, 128, 8
        $region24: #{tpu_custom_call.1} parent=11 // pred_fallthru
          _
        // Predicated region
        $region25: #{tpu_custom_call.1} parent=11 // pred_check
          %p191 = pneg %p126
        $region26: #{tpu_custom_call.1} parent=11 // pred_check_branch
          %193 = sbr.rel (%p191) target = $region28
        $region27: #{tpu_custom_call.1} parent=11 // pred_region
          _
        $region28: #{tpu_custom_call.1} parent=11 // pred_fallthru
          _
      $region12: #{tpu_custom_call.1} parent=5 // pred_fallthru
        _
      %p194 = scmp.lt.s32.totalorder %s16, 2
      // Predicated region
      $region29: #{tpu_custom_call.1} parent=5 // pred_check
        %p195 = pneg %p194
      $region30: #{tpu_custom_call.1} parent=5 // pred_check_branch
        %197 = sbr.rel (%p195) target = $region32
      $region31: #{tpu_custom_call.1} parent=5 // pred_region
        // Predicated region
        $region33: #{tpu_custom_call.1} parent=31 // pred_check
          %p198 = pneg %p36
        $region34: #{tpu_custom_call.1} parent=31 // pred_check_branch
          %200 = sbr.rel (%p198) target = $region36
        $region35: #{tpu_custom_call.1} parent=31 // pred_region
          %s201 = sand.u32 %s26, 1
          %s202 = scalar_lea.sflag [#allocation4], %s201
          %s203 = sand.u32 %s26, 1
          %s204 = smul.addr %s203, 32
          %s205 = scalar_lea.vmem [#allocation3], %s204
          %s207 = ssub.s32 512, 512
          %208 = vsyncadd %s202, %s207
          %s209 = smul.addr %s16, 64
          %s210 = scalar_lea.hbm %s0, %s209
          %s211 = sshll.u32 %s205, 4
          %s212 = int_to_ptr.vmem [resolvable:$true] %s211
          %217 = dma.hbm_to_vmem [thread:$0]  %s210, 512, %s212, %s202, 128, 64, 4
        $region36: #{tpu_custom_call.1} parent=31 // pred_fallthru
          _
      $region32: #{tpu_custom_call.1} parent=5 // pred_fallthru
        _
      %p218 = scmp.le.s32.totalorder 1, %s16
      %p219 = scmp.lt.s32.totalorder %s16, 3
      %p220 = pnand %p218, %p219
      %p221 = pneg %p220
      // Predicated region
      $region37: #{tpu_custom_call.1} parent=5 // pred_check
        _
      $region38: #{tpu_custom_call.1} parent=5 // pred_check_branch
        %223 = sbr.rel (%p220) target = $region40
      $region39: #{tpu_custom_call.1} parent=5 // pred_region
        %s224 = ssub.s32 %s16, 1
        %s225 = sand.u32 %s29, 1
        %s226 = scalar_lea.sflag [#allocation4], %s225
        %s227 = sand.u32 %s29, 1
        %s228 = smul.addr %s227, 32
        %s229 = scalar_lea.vmem [#allocation3], %s228
        // Predicated region
        $region41: #{tpu_custom_call.1} parent=39 // pred_check
          %p230 = pneg %p42
        $region42: #{tpu_custom_call.1} parent=39 // pred_check_branch
          %232 = sbr.rel (%p230) target = $region44
        $region43: #{tpu_custom_call.1} parent=39 // pred_region
          %233 = dma.done %s226, 512
        $region44: #{tpu_custom_call.1} parent=39 // pred_fallthru
          _
        // Predicated region
        $region45: #{tpu_custom_call.1} parent=39 // pred_check
          %p234 = pneg %p63
        $region46: #{tpu_custom_call.1} parent=39 // pred_check_branch
          %236 = sbr.rel (%p234) target = $region48
        $region47: #{tpu_custom_call.1} parent=39 // pred_region
          %237 = dma.done [#allocation7], 256
        $region48: #{tpu_custom_call.1} parent=39 // pred_fallthru
          _
        // Predicated region
        $region49: #{tpu_custom_call.1} parent=39 // pred_check
          %p238 = pneg %p105
        $region50: #{tpu_custom_call.1} parent=39 // pred_check_branch
          %240 = sbr.rel (%p238) target = $region52
        $region51: #{tpu_custom_call.1} parent=39 // pred_region
          %241 = dma.done [#allocation7], 2048
        $region52: #{tpu_custom_call.1} parent=39 // pred_fallthru
          _
        %s242 = sand.u32 %s29, 1
        %s243 = scalar_lea.sflag [#allocation4], %s242
        %s244 = sand.u32 %s29, 1
        %s245 = smul.addr %s244, 32
        %s246 = scalar_lea.vmem [#allocation3], %s245
        %p247 = pneg %p42
        %p248 = pneg %p39
        %p249 = pneg %p63
        %p250 = pneg %p60
        %p251 = pneg %p84
        %p252 = pneg %p81
        %p253 = pneg %p105
        %p254 = pneg %p102
        %p255 = pneg %p126
        %p256 = pneg %p123
        %p257 = pneg %p147
        %p258 = pneg %p144
        %p260 = scmp.eq.s32.totalorder %s21, 0
        // Predicated region
        $region53: #{tpu_custom_call.1} parent=39 // pred_check
          %p261 = pneg %p260
        $region54: #{tpu_custom_call.1} parent=39 // pred_check_branch
          %263 = sbr.rel (%p261) target = $region56
        $region55: #{tpu_custom_call.1} parent=39 // pred_region
          %264 = vst [vmem:[#allocation2] sm:$0xff] -inf
        $region56: #{tpu_custom_call.1} parent=39 // pred_fallthru
          _
        %v265 = vld [vmem:[%s229] sm:$0xf]
        %v266 = vld [vmem:[%s229 + $0x4] sm:$0xf]
        %v267 = vld [vmem:[%s229 + $0x8] sm:$0xf]
        %v268 = vld [vmem:[%s229 + $0xc] sm:$0xf]
        %v269 = vld [vmem:[%s229 + $0x10] sm:$0xf]
        %v270 = vld [vmem:[%s229 + $0x14] sm:$0xf]
        %v271 = vld [vmem:[%s229 + $0x18] sm:$0xf]
        %v272 = vld [vmem:[%s229 + $0x1c] sm:$0xf]
        %v273 = vld [vmem:[#allocation6] sm:$0xf]
        %v274 = vld [vmem:[#allocation6 + $0x4] sm:$0xf]
        %v275 = vld [vmem:[#allocation6 + $0x8] sm:$0xf]
        %v276 = vld [vmem:[#allocation6 + $0xc] sm:$0xf]
        %v277 = vld [vmem:[%s2] sm:$0x1]
        %v279 = vlaneseq
        %v280 = vshrl.u32 %v279, 7
        %v281 = vsub.s32 0, %v280
        %v282 = vrot.slane %v277, %v281
        %v292 = vunpack.c.l.b16 %v265
        %v293 = vunpack.c.l.b16 %v266
        %v294 = vunpack.c.l.b16 %v267
        %v295 = vunpack.c.l.b16 %v268
        %v296 = vunpack.c.l.b16 %v269
        %v297 = vunpack.c.l.b16 %v270
        %v298 = vunpack.c.l.b16 %v271
        %v299 = vunpack.c.l.b16 %v272
        %v300 = vpack.c.b16 %v293, %v292
        %v301 = vpack.c.b16 %v295, %v294
        %v302 = vpack.c.b16 %v297, %v296
        %v303 = vpack.c.b16 %v299, %v298
        %v308 = vunpack.c.l.b16 %v273
        %v309 = vunpack.c.l.b16 %v274
        %v310 = vunpack.c.l.b16 %v275
        %v311 = vunpack.c.l.b16 %v276
        %v312 = vpack.c.b16 %v309, %v308
        %v313 = vpack.c.b16 %v311, %v310
        %vm316 = vcmask 261120
        %v318 = vsel %vm316, %v300, 0
        %v321 = vsel %vm316, %v301, 0
        %v324 = vsel %vm316, %v302, 0
        %v327 = vsel %vm316, %v303, 0
        %329 = vmatprep.subr.bf16.mxu0 0
        %330 = vmatpush1.bf16.msra.mxu0 %v312
        %331 = vmatprep.subr.bf16.mxu0 0
        %332 = vmatpush1.bf16.msra.mxu0 %v313
        %333 = vmatprep.subr.bf16.mxu0 0
        %334 = vmatpush1.bf16.msra.mxu0 0
        %335 = vmatprep.subr.bf16.mxu0 0
        %336 = vmatpush1.bf16.msra.mxu0 0
        %337 = vmatprep.subr.bf16.mxu0 0
        %338 = vmatpush1.bf16.msra.mxu0 0
        %339 = vmatprep.subr.bf16.mxu0 0
        %340 = vmatpush1.bf16.msra.mxu0 0
        %341 = vmatprep.subr.bf16.mxu0 0
        %342 = vmatpush1.bf16.msra.mxu0 0
        %343 = vmatprep.subr.bf16.mxu0 0
        %344 = vmatpush1.bf16.msra.mxu0 0
        %345 = vmatprep.subr.bf16.mxu0 0
        %346 = vmatpush1.bf16.msra.mxu0 0
        %347 = vmatprep.subr.bf16.mxu0 0
        %348 = vmatpush1.bf16.msra.mxu0 0
        %349 = vmatprep.subr.bf16.mxu0 0
        %350 = vmatpush1.bf16.msra.mxu0 0
        %351 = vmatprep.subr.bf16.mxu0 0
        %352 = vmatpush1.bf16.msra.mxu0 0
        %353 = vmatprep.subr.bf16.mxu0 0
        %354 = vmatpush1.bf16.msra.mxu0 0
        %355 = vmatprep.subr.bf16.mxu0 0
        %356 = vmatpush1.bf16.msra.mxu0 0
        %357 = vmatprep.subr.bf16.mxu0 0
        %358 = vmatpush1.bf16.msra.mxu0 0
        %359 = vmatprep.subr.bf16.mxu0 0
        %360 = vmatpush1.bf16.msra.mxu0 0
        %361 = vmatprep.mubr.bf16.mxu0 0
        %362 = vmatmul.mubr.bf16.gmra.mrb[0].mxu0 %v318
        %v363 = vpop.f32.mrb[0].mxu0
        %v364 = vadd.f32 %v282, %v363
        %v365 = vpop.f32.mrb[0].mxu0
        %v366 = vpop.f32.mrb[0].mxu0
        %v367 = vadd.f32 %v282, %v366
        %v368 = vpop.f32.mrb[0].mxu0
        %369 = vmatprep.mubr.bf16.mxu0 0
        %370 = vmatmul.mubr.bf16.gmra.mrb[0].mxu0 %v321
        %v371 = vpop.f32.mrb[0].mxu0
        %v372 = vadd.f32 %v282, %v371
        %v373 = vpop.f32.mrb[0].mxu0
        %v374 = vpop.f32.mrb[0].mxu0
        %v375 = vadd.f32 %v282, %v374
        %v376 = vpop.f32.mrb[0].mxu0
        %377 = vmatprep.mubr.bf16.mxu0 0
        %378 = vmatmul.mubr.bf16.gmra.mrb[0].mxu0 %v324
        %v379 = vpop.f32.mrb[0].mxu0
        %v380 = vadd.f32 %v282, %v379
        %v381 = vpop.f32.mrb[0].mxu0
        %v382 = vpop.f32.mrb[0].mxu0
        %v383 = vadd.f32 %v282, %v382
        %v384 = vpop.f32.mrb[0].mxu0
        %385 = vmatprep.mubr.bf16.mxu0 0
        %386 = vmatmul.mubr.bf16.gmra.mrb[0].mxu0 %v327
        %v387 = vpop.f32.mrb[0].mxu0
        %v388 = vadd.f32 %v282, %v387
        %v389 = vpop.f32.mrb[0].mxu0
        %v390 = vpop.f32.mrb[0].mxu0
        %v391 = vadd.f32 %v282, %v390
        %v392 = vpop.f32.mrb[0].mxu0
        %393 = vdwg.mxu0
        %v394 = vtanh.pop %v364
        %v395 = vtanh.pop %v367
        %v396 = vtanh.pop %v372
        %v397 = vtanh.pop %v375
        %v398 = vtanh.pop %v380
        %v399 = vtanh.pop %v383
        %v400 = vtanh.pop %v388
        %v401 = vtanh.pop %v391
        %v402 = vld [vmem:[#allocation2] sm:$0xff]
        %v403 = vrot.slane %v394, 4
        %v404 = vmax.f32 %v394, %v403
        %v405 = vrot.slane %v404, 2
        %v406 = vmax.f32 %v404, %v405
        %v407 = vrot.slane %v406, 1
        %v408 = vmax.f32 %v406, %v407
        %v409 = vrot.slane %v395, 4
        %v410 = vmax.f32 %v395, %v409
        %v411 = vrot.slane %v410, 2
        %v412 = vmax.f32 %v410, %v411
        %v413 = vrot.slane %v412, 1
        %v414 = vmax.f32 %v412, %v413
        %v415 = vrot.slane %v396, 4
        %v416 = vmax.f32 %v396, %v415
        %v417 = vrot.slane %v416, 2
        %v418 = vmax.f32 %v416, %v417
        %v419 = vrot.slane %v418, 1
        %v420 = vmax.f32 %v418, %v419
        %v421 = vrot.slane %v397, 4
        %v422 = vmax.f32 %v397, %v421
        %v423 = vrot.slane %v422, 2
        %v424 = vmax.f32 %v422, %v423
        %v425 = vrot.slane %v424, 1
        %v426 = vmax.f32 %v424, %v425
        %v427 = vrot.slane %v398, 4
        %v428 = vmax.f32 %v398, %v427
        %v429 = vrot.slane %v428, 2
        %v430 = vmax.f32 %v428, %v429
        %v431 = vrot.slane %v430, 1
        %v432 = vmax.f32 %v430, %v431
        %v433 = vrot.slane %v399, 4
        %v434 = vmax.f32 %v399, %v433
        %v435 = vrot.slane %v434, 2
        %v436 = vmax.f32 %v434, %v435
        %v437 = vrot.slane %v436, 1
        %v438 = vmax.f32 %v436, %v437
        %v439 = vrot.slane %v400, 4
        %v440 = vmax.f32 %v400, %v439
        %v441 = vrot.slane %v440, 2
        %v442 = vmax.f32 %v440, %v441
        %v443 = vrot.slane %v442, 1
        %v444 = vmax.f32 %v442, %v443
        %v445 = vrot.slane %v401, 4
        %v446 = vmax.f32 %v401, %v445
        %v447 = vrot.slane %v446, 2
        %v448 = vmax.f32 %v446, %v447
        %v449 = vrot.slane %v448, 1
        %v450 = vmax.f32 %v448, %v449
        %vm459 = vcmask 1041409
        %v460 = vsel %vm459, %v414, %v408
        %vm461 = vcmask 1042434
        %v462 = vsel %vm461, %v420, %v460
        %vm463 = vcmask 1043459
        %v464 = vsel %vm463, %v426, %v462
        %vm465 = vcmask 1044484
        %v466 = vsel %vm465, %v432, %v464
        %vm467 = vcmask 1045509
        %v468 = vsel %vm467, %v438, %v466
        %vm469 = vcmask 1046534
        %v470 = vsel %vm469, %v444, %v468
        %vm471 = vcmask 1047559
        %v472 = vsel %vm471, %v450, %v470
        %v474 = vmax.f32 %v402, %v472
        %475 = vst [vmem:[#allocation2] sm:$0xff] %v474
        %p476 = scmp.eq.s32.totalorder %s21, 1
        // Predicated region
        $region57: #{tpu_custom_call.1} parent=39 // pred_check
          %p477 = pneg %p476
        $region58: #{tpu_custom_call.1} parent=39 // pred_check_branch
          %479 = sbr.rel (%p477) target = $region60
        $region59: #{tpu_custom_call.1} parent=39 // pred_region
          %v480 = vld [vmem:[#allocation2] sm:$0xff]
          %v481 = vld [vmem:[#allocation8] sm:$0xff]
          %v482 = vld [vmem:[#allocation8 + $0x8] sm:$0xff]
          %v483 = vld [vmem:[#allocation8 + $0x10] sm:$0xff]
          %v484 = vld [vmem:[#allocation8 + $0x18] sm:$0xff]
          %v485 = vld [vmem:[#allocation8 + $0x20] sm:$0xff]
          %v486 = vld [vmem:[#allocation8 + $0x28] sm:$0xff]
          %v487 = vld [vmem:[#allocation8 + $0x30] sm:$0xff]
          %v488 = vld [vmem:[#allocation8 + $0x38] sm:$0xff]
          %v489 = vld [vmem:[#allocation8 + $0x40] sm:$0xff]
          %v490 = vld [vmem:[#allocation8 + $0x48] sm:$0xff]
          %v491 = vld [vmem:[#allocation8 + $0x50] sm:$0xff]
          %v492 = vld [vmem:[#allocation8 + $0x58] sm:$0xff]
          %v493 = vld [vmem:[#allocation8 + $0x60] sm:$0xff]
          %v494 = vld [vmem:[#allocation8 + $0x68] sm:$0xff]
          %v495 = vld [vmem:[#allocation8 + $0x70] sm:$0xff]
          %v496 = vld [vmem:[#allocation8 + $0x78] sm:$0xff]
          %v497 = vld [vmem:[%s4] sm:$0x1]
          %v499 = vlaneseq
          %v500 = vshrl.u32 %v499, 7
          %v501 = vsub.s32 0, %v500
          %v502 = vrot.slane %v497, %v501
          %504 = vmatprep.subr.mxu0 0.0
          %505 = vmatpush1.msra.mxu0 %v481
          %506 = vmatprep.subr.mxu0 0.0
          %507 = vmatpush1.msra.mxu0 %v482
          %508 = vmatprep.subr.mxu0 0.0
          %509 = vmatpush1.msra.mxu0 %v483
          %510 = vmatprep.subr.mxu0 0.0
          %511 = vmatpush1.msra.mxu0 %v484
          %512 = vmatprep.subr.mxu0 0.0
          %513 = vmatpush1.msra.mxu0 %v485
          %514 = vmatprep.subr.mxu0 0.0
          %515 = vmatpush1.msra.mxu0 %v486
          %516 = vmatprep.subr.mxu0 0.0
          %517 = vmatpush1.msra.mxu0 %v487
          %518 = vmatprep.subr.mxu0 0.0
          %519 = vmatpush1.msra.mxu0 %v488
          %520 = vmatprep.subr.mxu0 0.0
          %521 = vmatpush1.msra.mxu0 %v489
          %522 = vmatprep.subr.mxu0 0.0
          %523 = vmatpush1.msra.mxu0 %v490
          %524 = vmatprep.subr.mxu0 0.0
          %525 = vmatpush1.msra.mxu0 %v491
          %526 = vmatprep.subr.mxu0 0.0
          %527 = vmatpush1.msra.mxu0 %v492
          %528 = vmatprep.subr.mxu0 0.0
          %529 = vmatpush1.msra.mxu0 %v493
          %530 = vmatprep.subr.mxu0 0.0
          %531 = vmatpush1.msra.mxu0 %v494
          %532 = vmatprep.subr.mxu0 0.0
          %533 = vmatpush1.msra.mxu0 %v495
          %534 = vmatprep.subr.mxu0 0.0
          %535 = vmatpush1.msra.mxu0 %v496
          %536 = vmatprep.subr.mxu0 0.0
          %537 = vmatpush1.msra.mxu0 0.0
          %538 = vmatprep.subr.mxu0 0.0
          %539 = vmatpush1.msra.mxu0 0.0
          %540 = vmatprep.subr.mxu0 0.0
          %541 = vmatpush1.msra.mxu0 0.0
          %542 = vmatprep.subr.mxu0 0.0
          %543 = vmatpush1.msra.mxu0 0.0
          %544 = vmatprep.subr.mxu0 0.0
          %545 = vmatpush1.msra.mxu0 0.0
          %546 = vmatprep.subr.mxu0 0.0
          %547 = vmatpush1.msra.mxu0 0.0
          %548 = vmatprep.subr.mxu0 0.0
          %549 = vmatpush1.msra.mxu0 0.0
          %550 = vmatprep.subr.mxu0 0.0
          %551 = vmatpush1.msra.mxu0 0.0
          %552 = vmatprep.subr.mxu0 0.0
          %553 = vmatpush1.msra.mxu0 0.0
          %554 = vmatprep.subr.mxu0 0.0
          %555 = vmatpush1.msra.mxu0 0.0
          %556 = vmatprep.subr.mxu0 0.0
          %557 = vmatpush1.msra.mxu0 0.0
          %558 = vmatprep.subr.mxu0 0.0
          %559 = vmatpush1.msra.mxu0 0.0
          %560 = vmatprep.subr.mxu0 0.0
          %561 = vmatpush1.msra.mxu0 0.0
          %562 = vmatprep.subr.mxu0 0.0
          %563 = vmatpush1.msra.mxu0 0.0
          %564 = vmatprep.subr.mxu0 0.0
          %565 = vmatpush1.msra.mxu0 0.0
          %566 = vmatprep.subr.mxu0 0.0
          %567 = vmatpush1.msra.mxu0 0.0
          %568 = vmatprep.mubr.f32.mxu0 0.0
          %569 = vmatmul.mubr.f32.gmra.mrb[0].mxu0 %v480
          %v570 = vpop.f32.mrb[0].mxu0
          %v571 = vadd.f32 %v502, %v570
          %v572 = vpop.f32.mrb[0].mxu0
          %573 = vdwg.mxu0
          %v574 = vxor.u32 %v571, 2147483648
          %v575 = vmul.f32 %v574, 1.442695
          %v576 = vpow.pop %v575
          %v577 = vadd.f32 %v576, 1.0
          %v578 = vrcp.pop %v577
          %v579 = vmul.f32 1.0, %v578
          %580 = vst [vmem:[#allocation9] sm:$0xff] %v579
        $region60: #{tpu_custom_call.1} parent=39 // pred_fallthru
          _
        // Predicated region
        $region61: #{tpu_custom_call.1} parent=39 // pred_check
          %p581 = pneg %p144
        $region62: #{tpu_custom_call.1} parent=39 // pred_check_branch
          %583 = sbr.rel (%p581) target = $region64
        $region63: #{tpu_custom_call.1} parent=39 // pred_region
          %s585 = ssub.s32 128, 128
          %586 = vsyncadd [#allocation5], %s585
          %s588 = sshll.u32 [#allocation9], 4
          %s589 = int_to_ptr.vmem [resolvable:$true] %s588
          %591 = dma.vmem_to_hbm [thread:$0]  %s589, 128, %s5, [#allocation5]
        $region64: #{tpu_custom_call.1} parent=39 // pred_fallthru
          _
        // Predicated region
        $region65: #{tpu_custom_call.1} parent=39 // pred_check
          %p592 = pneg %p144
        $region66: #{tpu_custom_call.1} parent=39 // pred_check_branch
          %594 = sbr.rel (%p592) target = $region68
        $region67: #{tpu_custom_call.1} parent=39 // pred_region
          %595 = dma.done [#allocation5], 128
        $region68: #{tpu_custom_call.1} parent=39 // pred_fallthru
          _
      $region40: #{tpu_custom_call.1} parent=5 // pred_fallthru
        _
      %p596 = scmp.le.s32.totalorder 2, %s16
      // Predicated region
      $region69: #{tpu_custom_call.1} parent=5 // pred_check
        %p597 = pneg %p596
      $region70: #{tpu_custom_call.1} parent=5 // pred_check_branch
        %599 = sbr.rel (%p597) target = $region72
      $region71: #{tpu_custom_call.1} parent=5 // pred_region
        %s600 = ssub.s32 %s16, 2
      $region72: #{tpu_custom_call.1} parent=5 // pred_fallthru
        _
    $region6: #{tpu_custom_call.1} parent=1 // loop_footer
      %s20 = sadd.s32 1, %s16
    $region7: #{tpu_custom_call.1} parent=1 // loop_footer_branch
      %15 = sbr.rel target = $region3
    $region8: #{tpu_custom_call.1} parent=1 // loop_exit
      _
    %601 = vsyncpa [#allocation4], 1
    %s602 = scalar_lea.sflag [#allocation4], 1
    %603 = vsyncpa %s602, 1
    %604 = vsyncpa [#allocation7], 1
    %605 = vsyncpa [#allocation5], 1
    %s606 = scalar_lea.sflag [#allocation5], 1
    %607 = vsyncpa %s606, 1

</llo_original>
